<compile_context>
chip_gen: v7x
topology: tpu7x:2x2x1
jax: 0.10.0
libtpu: 0.0.40
codegen_flags: <defaults>
</compile_context>

<pallas_src>
import functools

import jax
import jax.numpy as jnp
from jax.experimental import pallas as pl
from jax.experimental.pallas import tpu as pltpu


HALO = 128  # lane-aligned halo width of the in-VMEM shifted-tap scratch


def _round_up(n, m):
    return ((n + m - 1) // m) * m


def _conv_block_kernel(x_ref, w1_ref, b1_ref, w2_ref, b2_ref, m_ref, o_ref,
                       xh_ref, hh_ref, *, pad, K):
    """One grid step: fused conv1 -> relu -> conv2 -> relu on a flat (C, Nb) slab.

    x_ref : (Cin, Nb)          flat input slab, Nb = Bt*Lpp; element i's data at
                               columns [i*Lpp + pad, i*Lpp + pad + L), zeros elsewhere
    w1_ref: (K, Cout, Cin)     per-tap conv1 weights (compute dtype)
    b1_ref: (Cout, 1)          conv1 bias (f32)
    w2_ref: (K, Cout, Cout)    per-tap conv2 weights (compute dtype)
    b2_ref: (Cout, 1)          conv2 bias (f32)
    m_ref : (1, Nb)            1.0 on valid columns, 0.0 on per-element halo columns
    o_ref : (Cout, Nb)         flat output slab (lane-dense store)
    xh_ref: (Cin, Nb + 2*HALO) VMEM scratch: halo'd copy of x
    hh_ref: (Cout, Nb + 2*HALO) VMEM scratch: halo'd copy of relu(conv1)
    """
    Cin, Nb = x_ref.shape
    Cout = o_ref.shape[0]
    mask = m_ref[...]                      # (1, Nb) f32, broadcasts over channels

    # ---- stage x into the halo'd scratch (center store is lane-aligned) ----
    xh_ref[:, 0:HALO] = jnp.zeros((Cin, HALO), xh_ref.dtype)
    xh_ref[:, HALO + Nb:2 * HALO + Nb] = jnp.zeros((Cin, HALO), xh_ref.dtype)
    xh_ref[:, HALO:HALO + Nb] = x_ref[...]
    xh = xh_ref[...]                       # (Cin, Nb + 2*HALO)

    # ---- conv1 + bias + relu: K accumulated MXU matmuls over offset slices --
    acc = jnp.zeros((Cout, Nb), jnp.float32)
    for k in range(K):                     # K is a small static constant (3)
        tap = xh[:, HALO + k - pad:HALO + k - pad + Nb]        # (Cin, Nb)
        acc = acc + jnp.dot(w1_ref[k], tap, preferred_element_type=jnp.float32)
    h = jnp.maximum(acc + b1_ref[...], 0.0)
    h = h * mask                           # zero per-element halos == conv2's zero padding

    # ---- stage h into its halo'd scratch, then conv2 + bias + relu ---------
    hh_ref[:, 0:HALO] = jnp.zeros((Cout, HALO), hh_ref.dtype)
    hh_ref[:, HALO + Nb:2 * HALO + Nb] = jnp.zeros((Cout, HALO), hh_ref.dtype)
    hh_ref[:, HALO:HALO + Nb] = h.astype(hh_ref.dtype)
    hh = hh_ref[...]                       # (Cout, Nb + 2*HALO)

    acc2 = jnp.zeros((Cout, Nb), jnp.float32)
    for k in range(K):
        tap = hh[:, HALO + k - pad:HALO + k - pad + Nb]        # (Cout, Nb)
        acc2 = acc2 + jnp.dot(w2_ref[k], tap, preferred_element_type=jnp.float32)
    y = jnp.maximum(acc2 + b2_ref[...], 0.0)
    o_ref[...] = y.astype(o_ref.dtype)     # lane-dense store (Nb % 128 == 0)


def _step_vmem_bytes(Bt, Lpp, Cin, Cout, K, itemsize):
    """Rough per-grid-step VMEM footprint (double-buffered I/O + scratch + live f32)."""
    Nb = Bt * Lpp
    io = 2 * (Cin + Cout) * Nb * itemsize              # double-buffered in + out tiles
    scratch = (Cin + Cout) * (Nb + 2 * HALO) * itemsize
    interm = 4 * Cout * Nb * 4                          # acc / h / acc2 / y (f32)
    weights = K * Cout * (Cin + Cout) * itemsize + 2 * Cout * 4
    return io + scratch + interm + weights


def _pick_batch_tile(B, Lpp, Cin, Cout, K, itemsize, budget=10 << 20):
    """Largest divisor of B whose per-step footprint fits the VMEM budget.

    Fewest / biggest grid steps is best on 1-TC chips (v5e/v6e).  On v7x the
    "parallel" grid axis shards steps across 2 TensorCores, so prefer >= 2
    equally sized steps once each step already moves hundreds of KB.
    """
    for bt in range(B, 0, -1):
        if B % bt == 0 and _step_vmem_bytes(bt, Lpp, Cin, Cout, K, itemsize) <= budget:
            return bt
    return 1


@functools.partial(jax.jit, static_argnames=("pad",))
def conv_block_forward(x, w1, b1, w2, b2, *, pad=1):
    """x: (B, Cin, L), w1: (Cout, Cin, K), b1: (Cout,), w2: (Cout, Cout, K), b2: (Cout,).

    Returns (B, Cout, L), matching PyTorch conv_block.forward ('same' Conv1d).
    MXU operands use x.dtype: pass bf16 x / weights for the fast path on v6e/v7x
    (accumulation and the bias/ReLU epilogue stay f32).
    """
    B, Cin, L = x.shape
    Cout, _, K = w1.shape
    assert K == 2 * pad + 1, "kernel assumes 'same' padding (pad == (K - 1) // 2)"

    cdt = x.dtype                                   # MXU operand dtype
    itemsize = jnp.dtype(cdt).itemsize

    # Pad channels to sublane multiples so tiles are layout-aligned.
    Cin_p, Cout_p = _round_up(Cin, 8), _round_up(Cout, 8)

    # Per-element lane window: `pad` halo each side, rounded up to 128 lanes so
    # block boundaries and output stores are lane-aligned / lane-dense.
    Lpp = _round_up(L + 2 * pad, 128)

    # Flat (Cin_p, B*Lpp) slab; element i's data at columns [i*Lpp+pad, i*Lpp+pad+L).
    x_pad = jnp.pad(x.astype(cdt),
                    ((0, 0), (0, Cin_p - Cin), (pad, Lpp - L - pad)))
    x_flat = jnp.transpose(x_pad, (1, 0, 2)).reshape(Cin_p, B * Lpp)

    # Per-tap weights (K, Cout_p, Cin_p) / (K, Cout_p, Cout_p); f32 column biases.
    w1_t = jnp.pad(jnp.transpose(w1, (2, 0, 1)),
                   ((0, 0), (0, Cout_p - Cout), (0, Cin_p - Cin))).astype(cdt)
    w2_t = jnp.pad(jnp.transpose(w2, (2, 0, 1)),
                   ((0, 0), (0, Cout_p - Cout), (0, Cout_p - Cout))).astype(cdt)
    b1_c = jnp.pad(b1, (0, Cout_p - Cout)).reshape(Cout_p, 1).astype(jnp.float32)
    b2_c = jnp.pad(b2, (0, Cout_p - Cout)).reshape(Cout_p, 1).astype(jnp.float32)

    # Validity mask over lanes (built in the wrapper: zero in-kernel index math).
    pos = jnp.arange(B * Lpp, dtype=jnp.int32) % Lpp
    mask = ((pos >= pad) & (pos < pad + L)).astype(jnp.float32)[None, :]

    Bt = _pick_batch_tile(B, Lpp, Cin_p, Cout_p, K, itemsize)
    Nb = Bt * Lpp
    grid = (B // Bt,)
    vmem_limit = int(min(max(2 * _step_vmem_bytes(Bt, Lpp, Cin_p, Cout_p, K, itemsize),
                             16 << 20), 48 << 20))   # leave headroom on v7x's 64 MiB

    kernel = functools.partial(_conv_block_kernel, pad=pad, K=K)

    y_flat = pl.pallas_call(
        kernel,
        out_shape=jax.ShapeDtypeStruct((Cout_p, B * Lpp), x.dtype),
        grid=grid,
        in_specs=[
            pl.BlockSpec((Cin_p, Nb), lambda b: (0, b)),
            pl.BlockSpec((K, Cout_p, Cin_p), lambda b: (0, 0, 0)),
            pl.BlockSpec((Cout_p, 1), lambda b: (0, 0)),
            pl.BlockSpec((K, Cout_p, Cout_p), lambda b: (0, 0, 0)),
            pl.BlockSpec((Cout_p, 1), lambda b: (0, 0)),
            pl.BlockSpec((1, Nb), lambda b: (0, b)),
        ],
        out_specs=pl.BlockSpec((Cout_p, Nb), lambda b: (0, b)),
        scratch_shapes=[
            pltpu.VMEM((Cin_p, Nb + 2 * HALO), cdt),
            pltpu.VMEM((Cout_p, Nb + 2 * HALO), cdt),
        ],
        compiler_params=pltpu.CompilerParams(
            dimension_semantics=("parallel",),
            vmem_limit_bytes=vmem_limit,
        ),
    )(x_flat, w1_t, b1_c, w2_t, b2_c, mask)

    # (Cout_p, B*Lpp) -> (B, Cout, L): wrapper-side layout plumbing only.
    y = jnp.transpose(y_flat.reshape(Cout_p, B, Lpp), (1, 0, 2))
    return y[:, :Cout, pad:pad + L]


def _reference_conv_block(x_ncl, w1, b1, w2, b2, pad=1):
    """Pure-JAX reference mirroring torch.nn.Conv1d semantics (NCL)."""
    dn = jax.lax.conv_dimension_numbers(x_ncl.shape, w1.shape, ("NCH", "OIH", "NCH"))
    h = jax.lax.conv_general_dilated(
        x_ncl, w1, window_strides=(1,), padding=[(pad, pad)], dimension_numbers=dn
    ) + b1[None, :, None]
    h = jnp.maximum(h, 0.0)
    o = jax.lax.conv_general_dilated(
        h, w2, window_strides=(1,), padding=[(pad, pad)], dimension_numbers=dn
    ) + b2[None, :, None]
    return jnp.maximum(o, 0.0)


if __name__ == "__main__":
    # Small, deterministic problem: batch=2, in_c=4, out_c=8, length=16.
    B, Cin, Cout, L, K, pad = 2, 4, 8, 16, 3, 1

    key = jax.random.PRNGKey(0)
    kx, kw1, kb1, kw2, kb2 = jax.random.split(key, 5)

    x = jax.random.normal(kx, (B, Cin, L), dtype=jnp.float32)
    # Deterministic synthetic parameters in PyTorch Conv1d shapes.
    w1 = jax.random.normal(kw1, (Cout, Cin, K), dtype=jnp.float32) * 0.2
    b1 = jax.random.normal(kb1, (Cout,), dtype=jnp.float32) * 0.1
    w2 = jax.random.normal(kw2, (Cout, Cout, K), dtype=jnp.float32) * 0.2
    b2 = jax.random.normal(kb2, (Cout,), dtype=jnp.float32) * 0.1

    ref = _reference_conv_block(x, w1, b1, w2, b2, pad=pad)

    # f32 operands (PyTorch-default numerics).
    out = jax.block_until_ready(conv_block_forward(x, w1, b1, w2, b2, pad=pad))
    assert out.shape == (B, Cout, L)
    assert jnp.allclose(out, ref, atol=1e-4, rtol=1e-4)

    # bf16 MXU-operand path (recommended on v6e/v7x); f32 accumulate + epilogue.
    out_bf16 = jax.block_until_ready(
        conv_block_forward(x.astype(jnp.bfloat16), w1.astype(jnp.bfloat16), b1,
                           w2.astype(jnp.bfloat16), b2, pad=pad))
    assert out_bf16.dtype == jnp.bfloat16
    assert jnp.allclose(out_bf16.astype(jnp.float32), ref, atol=8e-2, rtol=8e-2)

    print("KERNEL_OK")
</pallas_src>

<mosaic_0001>
module attributes {stable_mosaic.version = 11 : i64} {
  func.func @_conv_block_kernel(%arg0: i32, %arg1: memref<8x256xf32, #tpu.memory_space<vmem>>, %arg2: memref<3x8x8xf32, #tpu.memory_space<vmem>>, %arg3: memref<8x1xf32, #tpu.memory_space<vmem>>, %arg4: memref<3x8x8xf32, #tpu.memory_space<vmem>>, %arg5: memref<8x1xf32, #tpu.memory_space<vmem>>, %arg6: memref<1x256xf32, #tpu.memory_space<vmem>>, %arg7: memref<8x256xf32, #tpu.memory_space<vmem>>, %arg8: memref<8x512xf32, #tpu.memory_space<vmem>>, %arg9: memref<8x512xf32, #tpu.memory_space<vmem>>) attributes {dimension_semantics = [#tpu.dimension_semantics<parallel>], iteration_bounds = array<i64: 1>, scalar_prefetch = 0 : i64, scratch_operands = 2 : i64, tpu.core_type = #tpu.core_type<tc>, window_params = [{transform_indices = @transform_0, window_bounds = array<i64: 8, 256>}, {pipeline_mode = #tpu.pipeline_mode<synchronous>, transform_indices = @transform_1, window_bounds = array<i64: 3, 8, 8>}, {pipeline_mode = #tpu.pipeline_mode<synchronous>, transform_indices = @transform_2, window_bounds = array<i64: 8, 1>}, {pipeline_mode = #tpu.pipeline_mode<synchronous>, transform_indices = @transform_3, window_bounds = array<i64: 3, 8, 8>}, {pipeline_mode = #tpu.pipeline_mode<synchronous>, transform_indices = @transform_4, window_bounds = array<i64: 8, 1>}, {transform_indices = @transform_5, window_bounds = array<i64: 1, 256>}, {transform_indices = @transform_6, window_bounds = array<i64: 8, 256>}]} {
    %c0 = arith.constant 0 : index
    %c0_0 = arith.constant 0 : index
    %0 = vector.load %arg6[%c0, %c0_0] : memref<1x256xf32, #tpu.memory_space<vmem>>, vector<1x256xf32>
    %cst = arith.constant 0.000000e+00 : f32
    %1 = vector.broadcast %cst : f32 to vector<8x128xf32>
    %c0_1 = arith.constant 0 : index
    %c0_2 = arith.constant 0 : index
    %2 = vector.load %arg8[%c0_1, %c0_2] : memref<8x512xf32, #tpu.memory_space<vmem>>, vector<8x128xf32>
    tpu.vector_store %arg8[%c0_1, %c0_2], %1 {strides = array<i32>} : memref<8x512xf32, #tpu.memory_space<vmem>>, vector<8x128xf32>,
    %cst_3 = arith.constant 0.000000e+00 : f32
    %3 = vector.broadcast %cst_3 : f32 to vector<8x128xf32>
    %c0_4 = arith.constant 0 : index
    %c384 = arith.constant 384 : index
    %4 = vector.load %arg8[%c0_4, %c384] : memref<8x512xf32, #tpu.memory_space<vmem>>, vector<8x128xf32>
    tpu.vector_store %arg8[%c0_4, %c384], %3 {strides = array<i32>} : memref<8x512xf32, #tpu.memory_space<vmem>>, vector<8x128xf32>,
    %c0_5 = arith.constant 0 : index
    %c0_6 = arith.constant 0 : index
    %5 = vector.load %arg1[%c0_5, %c0_6] : memref<8x256xf32, #tpu.memory_space<vmem>>, vector<8x256xf32>
    %c0_7 = arith.constant 0 : index
    %c128 = arith.constant 128 : index
    %6 = vector.load %arg8[%c0_7, %c128] : memref<8x512xf32, #tpu.memory_space<vmem>>, vector<8x256xf32>
    tpu.vector_store %arg8[%c0_7, %c128], %5 {strides = array<i32>} : memref<8x512xf32, #tpu.memory_space<vmem>>, vector<8x256xf32>,
    %c0_8 = arith.constant 0 : index
    %c0_9 = arith.constant 0 : index
    %7 = vector.load %arg8[%c0_8, %c0_9] : memref<8x512xf32, #tpu.memory_space<vmem>>, vector<8x512xf32>
    %cst_10 = arith.constant 0.000000e+00 : f32
    %8 = vector.broadcast %cst_10 : f32 to vector<8x256xf32>
    %9 = vector.extract_strided_slice %7 {offsets = [0, 127], sizes = [8, 256], strides = [1, 1]} : vector<8x512xf32> to vector<8x256xf32>
    %c0_11 = arith.constant 0 : index
    %c0_12 = arith.constant 0 : index
    %c0_13 = arith.constant 0 : index
    %10 = vector.load %arg2[%c0_11, %c0_12, %c0_13] : memref<3x8x8xf32, #tpu.memory_space<vmem>>, vector<1x8x8xf32>
    %11 = vector.shape_cast %10 : vector<1x8x8xf32> to vector<8x8xf32>
    %cst_14 = arith.constant dense<0.000000e+00> : vector<8x256xf32>
    %12 = tpu.matmul %11, %9, %cst_14 {dimension_numbers = #tpu.dot_dimension_numbers<[1], [0], [0], [1], [0, 0, 1, 1], [], []>} : vector<8x8xf32>, vector<8x256xf32>, vector<8x256xf32> -> vector<8x256xf32>
    %13 = arith.addf %8, %12 : vector<8x256xf32>
    %14 = vector.extract_strided_slice %7 {offsets = [0, 128], sizes = [8, 256], strides = [1, 1]} : vector<8x512xf32> to vector<8x256xf32>
    %c1 = arith.constant 1 : index
    %c0_15 = arith.constant 0 : index
    %c0_16 = arith.constant 0 : index
    %15 = vector.load %arg2[%c1, %c0_15, %c0_16] : memref<3x8x8xf32, #tpu.memory_space<vmem>>, vector<1x8x8xf32>
    %16 = vector.shape_cast %15 : vector<1x8x8xf32> to vector<8x8xf32>
    %cst_17 = arith.constant dense<0.000000e+00> : vector<8x256xf32>
    %17 = tpu.matmul %16, %14, %cst_17 {dimension_numbers = #tpu.dot_dimension_numbers<[1], [0], [0], [1], [0, 0, 1, 1], [], []>} : vector<8x8xf32>, vector<8x256xf32>, vector<8x256xf32> -> vector<8x256xf32>
    %18 = arith.addf %13, %17 : vector<8x256xf32>
    %19 = vector.extract_strided_slice %7 {offsets = [0, 129], sizes = [8, 256], strides = [1, 1]} : vector<8x512xf32> to vector<8x256xf32>
    %c2 = arith.constant 2 : index
    %c0_18 = arith.constant 0 : index
    %c0_19 = arith.constant 0 : index
    %20 = vector.load %arg2[%c2, %c0_18, %c0_19] : memref<3x8x8xf32, #tpu.memory_space<vmem>>, vector<1x8x8xf32>
    %21 = vector.shape_cast %20 : vector<1x8x8xf32> to vector<8x8xf32>
    %cst_20 = arith.constant dense<0.000000e+00> : vector<8x256xf32>
    %22 = tpu.matmul %21, %19, %cst_20 {dimension_numbers = #tpu.dot_dimension_numbers<[1], [0], [0], [1], [0, 0, 1, 1], [], []>} : vector<8x8xf32>, vector<8x256xf32>, vector<8x256xf32> -> vector<8x256xf32>
    %23 = arith.addf %18, %22 : vector<8x256xf32>
    %c0_21 = arith.constant 0 : index
    %c0_22 = arith.constant 0 : index
    %24 = vector.load %arg3[%c0_21, %c0_22] : memref<8x1xf32, #tpu.memory_space<vmem>>, vector<8x1xf32>
    %25 = vector.broadcast %24 : vector<8x1xf32> to vector<8x256xf32>
    %26 = arith.addf %23, %25 : vector<8x256xf32>
    %cst_23 = arith.constant 0.000000e+00 : f32
    %27 = vector.broadcast %cst_23 : f32 to vector<8x256xf32>
    %28 = arith.maximumf %26, %27 : vector<8x256xf32>
    %29 = vector.broadcast %0 : vector<1x256xf32> to vector<8x256xf32>
    %30 = arith.mulf %28, %29 : vector<8x256xf32>
    %cst_24 = arith.constant 0.000000e+00 : f32
    %31 = vector.broadcast %cst_24 : f32 to vector<8x128xf32>
    %c0_25 = arith.constant 0 : index
    %c0_26 = arith.constant 0 : index
    %32 = vector.load %arg9[%c0_25, %c0_26] : memref<8x512xf32, #tpu.memory_space<vmem>>, vector<8x128xf32>
    tpu.vector_store %arg9[%c0_25, %c0_26], %31 {strides = array<i32>} : memref<8x512xf32, #tpu.memory_space<vmem>>, vector<8x128xf32>,
    %cst_27 = arith.constant 0.000000e+00 : f32
    %33 = vector.broadcast %cst_27 : f32 to vector<8x128xf32>
    %c0_28 = arith.constant 0 : index
    %c384_29 = arith.constant 384 : index
    %34 = vector.load %arg9[%c0_28, %c384_29] : memref<8x512xf32, #tpu.memory_space<vmem>>, vector<8x128xf32>
    tpu.vector_store %arg9[%c0_28, %c384_29], %33 {strides = array<i32>} : memref<8x512xf32, #tpu.memory_space<vmem>>, vector<8x128xf32>,
    %c0_30 = arith.constant 0 : index
    %c128_31 = arith.constant 128 : index
    %35 = vector.load %arg9[%c0_30, %c128_31] : memref<8x512xf32, #tpu.memory_space<vmem>>, vector<8x256xf32>
    tpu.vector_store %arg9[%c0_30, %c128_31], %30 {strides = array<i32>} : memref<8x512xf32, #tpu.memory_space<vmem>>, vector<8x256xf32>,
    %c0_32 = arith.constant 0 : index
    %c0_33 = arith.constant 0 : index
    %36 = vector.load %arg9[%c0_32, %c0_33] : memref<8x512xf32, #tpu.memory_space<vmem>>, vector<8x512xf32>
    %cst_34 = arith.constant 0.000000e+00 : f32
    %37 = vector.broadcast %cst_34 : f32 to vector<8x256xf32>
    %38 = vector.extract_strided_slice %36 {offsets = [0, 127], sizes = [8, 256], strides = [1, 1]} : vector<8x512xf32> to vector<8x256xf32>
    %c0_35 = arith.constant 0 : index
    %c0_36 = arith.constant 0 : index
    %c0_37 = arith.constant 0 : index
    %39 = vector.load %arg4[%c0_35, %c0_36, %c0_37] : memref<3x8x8xf32, #tpu.memory_space<vmem>>, vector<1x8x8xf32>
    %40 = vector.shape_cast %39 : vector<1x8x8xf32> to vector<8x8xf32>
    %cst_38 = arith.constant dense<0.000000e+00> : vector<8x256xf32>
    %41 = tpu.matmul %40, %38, %cst_38 {dimension_numbers = #tpu.dot_dimension_numbers<[1], [0], [0], [1], [0, 0, 1, 1], [], []>} : vector<8x8xf32>, vector<8x256xf32>, vector<8x256xf32> -> vector<8x256xf32>
    %42 = arith.addf %37, %41 : vector<8x256xf32>
    %43 = vector.extract_strided_slice %36 {offsets = [0, 128], sizes = [8, 256], strides = [1, 1]} : vector<8x512xf32> to vector<8x256xf32>
    %c1_39 = arith.constant 1 : index
    %c0_40 = arith.constant 0 : index
    %c0_41 = arith.constant 0 : index
    %44 = vector.load %arg4[%c1_39, %c0_40, %c0_41] : memref<3x8x8xf32, #tpu.memory_space<vmem>>, vector<1x8x8xf32>
    %45 = vector.shape_cast %44 : vector<1x8x8xf32> to vector<8x8xf32>
    %cst_42 = arith.constant dense<0.000000e+00> : vector<8x256xf32>
    %46 = tpu.matmul %45, %43, %cst_42 {dimension_numbers = #tpu.dot_dimension_numbers<[1], [0], [0], [1], [0, 0, 1, 1], [], []>} : vector<8x8xf32>, vector<8x256xf32>, vector<8x256xf32> -> vector<8x256xf32>
    %47 = arith.addf %42, %46 : vector<8x256xf32>
    %48 = vector.extract_strided_slice %36 {offsets = [0, 129], sizes = [8, 256], strides = [1, 1]} : vector<8x512xf32> to vector<8x256xf32>
    %c2_43 = arith.constant 2 : index
    %c0_44 = arith.constant 0 : index
    %c0_45 = arith.constant 0 : index
    %49 = vector.load %arg4[%c2_43, %c0_44, %c0_45] : memref<3x8x8xf32, #tpu.memory_space<vmem>>, vector<1x8x8xf32>
    %50 = vector.shape_cast %49 : vector<1x8x8xf32> to vector<8x8xf32>
    %cst_46 = arith.constant dense<0.000000e+00> : vector<8x256xf32>
    %51 = tpu.matmul %50, %48, %cst_46 {dimension_numbers = #tpu.dot_dimension_numbers<[1], [0], [0], [1], [0, 0, 1, 1], [], []>} : vector<8x8xf32>, vector<8x256xf32>, vector<8x256xf32> -> vector<8x256xf32>
    %52 = arith.addf %47, %51 : vector<8x256xf32>
    %c0_47 = arith.constant 0 : index
    %c0_48 = arith.constant 0 : index
    %53 = vector.load %arg5[%c0_47, %c0_48] : memref<8x1xf32, #tpu.memory_space<vmem>>, vector<8x1xf32>
    %54 = vector.broadcast %53 : vector<8x1xf32> to vector<8x256xf32>
    %55 = arith.addf %52, %54 : vector<8x256xf32>
    %cst_49 = arith.constant 0.000000e+00 : f32
    %56 = vector.broadcast %cst_49 : f32 to vector<8x256xf32>
    %57 = arith.maximumf %55, %56 : vector<8x256xf32>
    %c0_50 = arith.constant 0 : index
    %c0_51 = arith.constant 0 : index
    %58 = vector.load %arg7[%c0_50, %c0_51] : memref<8x256xf32, #tpu.memory_space<vmem>>, vector<8x256xf32>
    tpu.vector_store %arg7[%c0_50, %c0_51], %57 {strides = array<i32>} : memref<8x256xf32, #tpu.memory_space<vmem>>, vector<8x256xf32>,
    return
  }
  func.func @transform_0(%arg0: i32) -> (i32, i32) {
    %c0_i32 = arith.constant 0 : i32
    %c0_i32_0 = arith.constant 0 : i32
    return %c0_i32, %arg0 : i32, i32
  }
  func.func @transform_1(%arg0: i32) -> (i32, i32, i32) {
    %c0_i32 = arith.constant 0 : i32
    %c0_i32_0 = arith.constant 0 : i32
    %c0_i32_1 = arith.constant 0 : i32
    %c0_i32_2 = arith.constant 0 : i32
    return %c0_i32, %c0_i32_0, %c0_i32_1 : i32, i32, i32
  }
  func.func @transform_2(%arg0: i32) -> (i32, i32) {
    %c0_i32 = arith.constant 0 : i32
    %c0_i32_0 = arith.constant 0 : i32
    %c0_i32_1 = arith.constant 0 : i32
    return %c0_i32, %c0_i32_0 : i32, i32
  }
  func.func @transform_3(%arg0: i32) -> (i32, i32, i32) {
    %c0_i32 = arith.constant 0 : i32
    %c0_i32_0 = arith.constant 0 : i32
    %c0_i32_1 = arith.constant 0 : i32
    %c0_i32_2 = arith.constant 0 : i32
    return %c0_i32, %c0_i32_0, %c0_i32_1 : i32, i32, i32
  }
  func.func @transform_4(%arg0: i32) -> (i32, i32) {
    %c0_i32 = arith.constant 0 : i32
    %c0_i32_0 = arith.constant 0 : i32
    %c0_i32_1 = arith.constant 0 : i32
    return %c0_i32, %c0_i32_0 : i32, i32
  }
  func.func @transform_5(%arg0: i32) -> (i32, i32) {
    %c0_i32 = arith.constant 0 : i32
    %c0_i32_0 = arith.constant 0 : i32
    return %c0_i32, %arg0 : i32, i32
  }
  func.func @transform_6(%arg0: i32) -> (i32, i32) {
    %c0_i32 = arith.constant 0 : i32
    %c0_i32_0 = arith.constant 0 : i32
    return %c0_i32, %arg0 : i32, i32
  }
}

</mosaic_0001>

<llo_original>
// kernel: conv_block_forward.1
$region0: #{conv_block_forward.1}
  #allocation0 [shape = 'u32[]', space=smem, size = 0x4, offset = 0x4, fixed_abs, tag = 'smem constant byte address 0x4 - core index']
  #allocation1 [shape = 'u32[144,128]{1,0:T(1,128)}', space=vmem, size = 0x12000, scoped, tag = 'internal scratch']
  #allocation2 [shape = 'f32[8,512]{1,0:T(8,128)}', space=vmem, size = 0x4000, scoped, tag = 'scratch operand']
  #allocation3 [shape = 'f32[8,512]{1,0:T(8,128)}', space=vmem, size = 0x4000, scoped, tag = 'scratch operand']
  %s0 = inlined_call_operand.vmem [shape: f32[8,256], index: 0, kind: input, shape index: {}]
  %s1 = inlined_call_operand.vmem [shape: f32[3,8,8], index: 1, kind: input, shape index: {}]
  %s2 = inlined_call_operand.vmem [shape: f32[8,1], index: 2, kind: input, shape index: {}]
  %s3 = inlined_call_operand.vmem [shape: f32[3,8,8], index: 3, kind: input, shape index: {}]
  %s4 = inlined_call_operand.vmem [shape: f32[8,1], index: 4, kind: input, shape index: {}]
  %s5 = inlined_call_operand.vmem [shape: f32[1,256], index: 5, kind: input, shape index: {}]
  %s6 = inlined_call_operand.vmem [shape: f32[8,256], index: 6, kind: output, shape index: {}]
  %s7 = sld [smem:[#allocation0]]
  $region34: #{conv_block_forward.1} parent=0
    _
  %s9 = ssub.s32 1, %s7
  %s10 = scalar_select 0, %s9, %s7
  // Predicated region
  $region2: #{conv_block_forward.1} parent=0 // pred_check
    _
  $region3: #{conv_block_forward.1} parent=0 // pred_check_branch
    %12 = sbr.rel (0) target = $region5
  $region4: #{conv_block_forward.1} parent=0 // pred_region
    _
  $region5: #{conv_block_forward.1} parent=0 // pred_fallthru
    _
  // Predicated region
  $region6: #{conv_block_forward.1} parent=0 // pred_check
    _
  $region7: #{conv_block_forward.1} parent=0 // pred_check_branch
    %14 = sbr.rel (0) target = $region9
  $region8: #{conv_block_forward.1} parent=0 // pred_region
    _
  $region9: #{conv_block_forward.1} parent=0 // pred_fallthru
    _
  // Predicated region
  $region10: #{conv_block_forward.1} parent=0 // pred_check
    _
  $region11: #{conv_block_forward.1} parent=0 // pred_check_branch
    %16 = sbr.rel (0) target = $region13
  $region12: #{conv_block_forward.1} parent=0 // pred_region
    _
  $region13: #{conv_block_forward.1} parent=0 // pred_fallthru
    _
  // Predicated region
  $region14: #{conv_block_forward.1} parent=0 // pred_check
    _
  $region15: #{conv_block_forward.1} parent=0 // pred_check_branch
    %18 = sbr.rel (0) target = $region17
  $region16: #{conv_block_forward.1} parent=0 // pred_region
    _
  $region17: #{conv_block_forward.1} parent=0 // pred_fallthru
    _
  // Predicated region
  $region18: #{conv_block_forward.1} parent=0 // pred_check
    _
  $region19: #{conv_block_forward.1} parent=0 // pred_check_branch
    %20 = sbr.rel (0) target = $region21
  $region20: #{conv_block_forward.1} parent=0 // pred_region
    _
  $region21: #{conv_block_forward.1} parent=0 // pred_fallthru
    _
  // Predicated region
  $region22: #{conv_block_forward.1} parent=0 // pred_check
    _
  $region23: #{conv_block_forward.1} parent=0 // pred_check_branch
    %22 = sbr.rel (0) target = $region25
  $region24: #{conv_block_forward.1} parent=0 // pred_region
    _
  $region25: #{conv_block_forward.1} parent=0 // pred_fallthru
    _
  %v23 = vld [vmem:[%s5] sm:$0x3]
  %24 = vst [vmem:[#allocation2] sm:$0xff] 0.0
  %25 = vst [vmem:[#allocation2 + $0x18] sm:$0xff] 0.0
  %v26 = vld [vmem:[%s0] sm:$0xff]
  %v27 = vld [vmem:[%s0 + $0x8] sm:$0xff]
  %28 = vst [vmem:[#allocation2 + $0x8] sm:$0xff] %v26
  %29 = vst [vmem:[#allocation2 + $0x10] sm:$0xff] %v27
  %v30 = vld [vmem:[#allocation2] sm:$0xff]
  %v31 = vld [vmem:[#allocation2 + $0x8] sm:$0xff]
  %v32 = vld [vmem:[#allocation2 + $0x10] sm:$0xff]
  %v33 = vld [vmem:[#allocation2 + $0x18] sm:$0xff]
  %v34 = vld [vmem:[%s1] sm:$0xff]
  %s35 = scalar_lea.vmem %s1, 8
  %v36 = vld [vmem:[%s35] sm:$0xff]
  %vm37 = vcmask 64512
  %v39 = vsel %vm37, %v36, 0
  %41 = vmatprep.subr.mxu0 %v32
  %42 = vmatpush1.msra.mxu0 %v31
  %43 = vmatprep.subr.mxu0 0.0
  %44 = vmatpush1.msra.mxu0 0.0
  %45 = vmatprep.subr.mxu0 0.0
  %46 = vmatpush1.msra.mxu0 0.0
  %47 = vmatprep.subr.mxu0 0.0
  %48 = vmatpush1.msra.mxu0 0.0
  %49 = vmatprep.subr.mxu0 0.0
  %50 = vmatpush1.msra.mxu0 0.0
  %51 = vmatprep.subr.mxu0 0.0
  %52 = vmatpush1.msra.mxu0 0.0
  %53 = vmatprep.subr.mxu0 0.0
  %54 = vmatpush1.msra.mxu0 0.0
  %55 = vmatprep.subr.mxu0 0.0
  %56 = vmatpush1.msra.mxu0 0.0
  %57 = vmatprep.subr.mxu0 0.0
  %58 = vmatpush1.msra.mxu0 0.0
  %59 = vmatprep.subr.mxu0 0.0
  %60 = vmatpush1.msra.mxu0 0.0
  %61 = vmatprep.subr.mxu0 0.0
  %62 = vmatpush1.msra.mxu0 0.0
  %63 = vmatprep.subr.mxu0 0.0
  %64 = vmatpush1.msra.mxu0 0.0
  %65 = vmatprep.subr.mxu0 0.0
  %66 = vmatpush1.msra.mxu0 0.0
  %67 = vmatprep.subr.mxu0 0.0
  %68 = vmatpush1.msra.mxu0 0.0
  %69 = vmatprep.subr.mxu0 0.0
  %70 = vmatpush1.msra.mxu0 0.0
  %71 = vmatprep.subr.mxu0 0.0
  %72 = vmatpush1.msra.mxu0 0.0
  %73 = vmatprep.subr.mxu0 0.0
  %74 = vmatpush1.msra.mxu0 0.0
  %75 = vmatprep.subr.mxu0 0.0
  %76 = vmatpush1.msra.mxu0 0.0
  %77 = vmatprep.subr.mxu0 0.0
  %78 = vmatpush1.msra.mxu0 0.0
  %79 = vmatprep.subr.mxu0 0.0
  %80 = vmatpush1.msra.mxu0 0.0
  %81 = vmatprep.subr.mxu0 0.0
  %82 = vmatpush1.msra.mxu0 0.0
  %83 = vmatprep.subr.mxu0 0.0
  %84 = vmatpush1.msra.mxu0 0.0
  %85 = vmatprep.subr.mxu0 0.0
  %86 = vmatpush1.msra.mxu0 0.0
  %87 = vmatprep.subr.mxu0 0.0
  %88 = vmatpush1.msra.mxu0 0.0
  %89 = vmatprep.subr.mxu0 0.0
  %90 = vmatpush1.msra.mxu0 0.0
  %91 = vmatprep.subr.mxu0 0.0
  %92 = vmatpush1.msra.mxu0 0.0
  %93 = vmatprep.subr.mxu0 0.0
  %94 = vmatpush1.msra.mxu0 0.0
  %95 = vmatprep.subr.mxu0 0.0
  %96 = vmatpush1.msra.mxu0 0.0
  %97 = vmatprep.subr.mxu0 0.0
  %98 = vmatpush1.msra.mxu0 0.0
  %99 = vmatprep.subr.mxu0 0.0
  %100 = vmatpush1.msra.mxu0 0.0
  %101 = vmatprep.subr.mxu0 0.0
  %102 = vmatpush1.msra.mxu0 0.0
  %103 = vmatprep.subr.mxu0 0.0
  %104 = vmatpush1.msra.mxu0 0.0
  %105 = vmatprep.mubr.f32.mxu0 0.0
  %106 = vmatmul.mubr.f32.gmra.mrb[0].mxu0 %v39
  %v107 = vpop.f32.mrb[0].mxu0
  %v108 = vadd.f32 0.0, %v107
  %v109 = vpop.f32.mrb[0].mxu0
  %v110 = vadd.f32 0.0, %v109
  %111 = vdwg.mxu0
  %115 = vrot.lane.b32.xlu0 %v30, 1
  %v116 = vpop.permute.xlu0 %115
  %117 = vrot.lane.b32.xlu0 %v31, 1
  %v118 = vpop.permute.xlu0 %117
  %119 = vrot.lane.b32.xlu0 %v32, 1
  %v120 = vpop.permute.xlu0 %119
  %vm121 = vcmask 7168
  %v122 = vsel %vm121, %v116, %v118
  %v123 = vsel %vm121, %v118, %v120
  %v127 = vsel %vm37, %v34, 0
  %129 = vmatprep.subr.mxu0 %v123
  %130 = vmatpush1.msra.mxu0 %v122
  %131 = vmatprep.subr.mxu0 0.0
  %132 = vmatpush1.msra.mxu0 0.0
  %133 = vmatprep.subr.mxu0 0.0
  %134 = vmatpush1.msra.mxu0 0.0
  %135 = vmatprep.subr.mxu0 0.0
  %136 = vmatpush1.msra.mxu0 0.0
  %137 = vmatprep.subr.mxu0 0.0
  %138 = vmatpush1.msra.mxu0 0.0
  %139 = vmatprep.subr.mxu0 0.0
  %140 = vmatpush1.msra.mxu0 0.0
  %141 = vmatprep.subr.mxu0 0.0
  %142 = vmatpush1.msra.mxu0 0.0
  %143 = vmatprep.subr.mxu0 0.0
  %144 = vmatpush1.msra.mxu0 0.0
  %145 = vmatprep.subr.mxu0 0.0
  %146 = vmatpush1.msra.mxu0 0.0
  %147 = vmatprep.subr.mxu0 0.0
  %148 = vmatpush1.msra.mxu0 0.0
  %149 = vmatprep.subr.mxu0 0.0
  %150 = vmatpush1.msra.mxu0 0.0
  %151 = vmatprep.subr.mxu0 0.0
  %152 = vmatpush1.msra.mxu0 0.0
  %153 = vmatprep.subr.mxu0 0.0
  %154 = vmatpush1.msra.mxu0 0.0
  %155 = vmatprep.subr.mxu0 0.0
  %156 = vmatpush1.msra.mxu0 0.0
  %157 = vmatprep.subr.mxu0 0.0
  %158 = vmatpush1.msra.mxu0 0.0
  %159 = vmatprep.subr.mxu0 0.0
  %160 = vmatpush1.msra.mxu0 0.0
  %161 = vmatprep.subr.mxu0 0.0
  %162 = vmatpush1.msra.mxu0 0.0
  %163 = vmatprep.subr.mxu0 0.0
  %164 = vmatpush1.msra.mxu0 0.0
  %165 = vmatprep.subr.mxu0 0.0
  %166 = vmatpush1.msra.mxu0 0.0
  %167 = vmatprep.subr.mxu0 0.0
  %168 = vmatpush1.msra.mxu0 0.0
  %169 = vmatprep.subr.mxu0 0.0
  %170 = vmatpush1.msra.mxu0 0.0
  %171 = vmatprep.subr.mxu0 0.0
  %172 = vmatpush1.msra.mxu0 0.0
  %173 = vmatprep.subr.mxu0 0.0
  %174 = vmatpush1.msra.mxu0 0.0
  %175 = vmatprep.subr.mxu0 0.0
  %176 = vmatpush1.msra.mxu0 0.0
  %177 = vmatprep.subr.mxu0 0.0
  %178 = vmatpush1.msra.mxu0 0.0
  %179 = vmatprep.subr.mxu0 0.0
  %180 = vmatpush1.msra.mxu0 0.0
  %181 = vmatprep.subr.mxu0 0.0
  %182 = vmatpush1.msra.mxu0 0.0
  %183 = vmatprep.subr.mxu0 0.0
  %184 = vmatpush1.msra.mxu0 0.0
  %185 = vmatprep.subr.mxu0 0.0
  %186 = vmatpush1.msra.mxu0 0.0
  %187 = vmatprep.subr.mxu0 0.0
  %188 = vmatpush1.msra.mxu0 0.0
  %189 = vmatprep.subr.mxu0 0.0
  %190 = vmatpush1.msra.mxu0 0.0
  %191 = vmatprep.subr.mxu0 0.0
  %192 = vmatpush1.msra.mxu0 0.0
  %193 = vmatprep.mubr.f32.mxu0 0.0
  %194 = vmatmul.mubr.f32.gmra.mrb[0].mxu0 %v127
  %v195 = vpop.f32.mrb[0].mxu0
  %v196 = vadd.f32 %v108, %v195
  %v197 = vpop.f32.mrb[0].mxu0
  %v198 = vadd.f32 %v110, %v197
  %199 = vdwg.mxu0
  %s200 = scalar_lea.vmem %s1, 16
  %v201 = vld [vmem:[%s200] sm:$0xff]
  %203 = vrot.lane.b32.xlu0 %v31, 127
  %v204 = vpop.permute.xlu0 %203
  %205 = vrot.lane.b32.xlu0 %v32, 127
  %v206 = vpop.permute.xlu0 %205
  %207 = vrot.lane.b32.xlu0 %v33, 127
  %v208 = vpop.permute.xlu0 %207
  %vm209 = vcmask 1039360
  %v210 = vsel %vm209, %v204, %v206
  %v211 = vsel %vm209, %v206, %v208
  %v215 = vsel %vm37, %v201, 0
  %217 = vmatprep.subr.mxu0 %v211
  %218 = vmatpush1.msra.mxu0 %v210
  %219 = vmatprep.subr.mxu0 0.0
  %220 = vmatpush1.msra.mxu0 0.0
  %221 = vmatprep.subr.mxu0 0.0
  %222 = vmatpush1.msra.mxu0 0.0
  %223 = vmatprep.subr.mxu0 0.0
  %224 = vmatpush1.msra.mxu0 0.0
  %225 = vmatprep.subr.mxu0 0.0
  %226 = vmatpush1.msra.mxu0 0.0
  %227 = vmatprep.subr.mxu0 0.0
  %228 = vmatpush1.msra.mxu0 0.0
  %229 = vmatprep.subr.mxu0 0.0
  %230 = vmatpush1.msra.mxu0 0.0
  %231 = vmatprep.subr.mxu0 0.0
  %232 = vmatpush1.msra.mxu0 0.0
  %233 = vmatprep.subr.mxu0 0.0
  %234 = vmatpush1.msra.mxu0 0.0
  %235 = vmatprep.subr.mxu0 0.0
  %236 = vmatpush1.msra.mxu0 0.0
  %237 = vmatprep.subr.mxu0 0.0
  %238 = vmatpush1.msra.mxu0 0.0
  %239 = vmatprep.subr.mxu0 0.0
  %240 = vmatpush1.msra.mxu0 0.0
  %241 = vmatprep.subr.mxu0 0.0
  %242 = vmatpush1.msra.mxu0 0.0
  %243 = vmatprep.subr.mxu0 0.0
  %244 = vmatpush1.msra.mxu0 0.0
  %245 = vmatprep.subr.mxu0 0.0
  %246 = vmatpush1.msra.mxu0 0.0
  %247 = vmatprep.subr.mxu0 0.0
  %248 = vmatpush1.msra.mxu0 0.0
  %249 = vmatprep.subr.mxu0 0.0
  %250 = vmatpush1.msra.mxu0 0.0
  %251 = vmatprep.subr.mxu0 0.0
  %252 = vmatpush1.msra.mxu0 0.0
  %253 = vmatprep.subr.mxu0 0.0
  %254 = vmatpush1.msra.mxu0 0.0
  %255 = vmatprep.subr.mxu0 0.0
  %256 = vmatpush1.msra.mxu0 0.0
  %257 = vmatprep.subr.mxu0 0.0
  %258 = vmatpush1.msra.mxu0 0.0
  %259 = vmatprep.subr.mxu0 0.0
  %260 = vmatpush1.msra.mxu0 0.0
  %261 = vmatprep.subr.mxu0 0.0
  %262 = vmatpush1.msra.mxu0 0.0
  %263 = vmatprep.subr.mxu0 0.0
  %264 = vmatpush1.msra.mxu0 0.0
  %265 = vmatprep.subr.mxu0 0.0
  %266 = vmatpush1.msra.mxu0 0.0
  %267 = vmatprep.subr.mxu0 0.0
  %268 = vmatpush1.msra.mxu0 0.0
  %269 = vmatprep.subr.mxu0 0.0
  %270 = vmatpush1.msra.mxu0 0.0
  %271 = vmatprep.subr.mxu0 0.0
  %272 = vmatpush1.msra.mxu0 0.0
  %273 = vmatprep.subr.mxu0 0.0
  %274 = vmatpush1.msra.mxu0 0.0
  %275 = vmatprep.subr.mxu0 0.0
  %276 = vmatpush1.msra.mxu0 0.0
  %277 = vmatprep.subr.mxu0 0.0
  %278 = vmatpush1.msra.mxu0 0.0
  %279 = vmatprep.subr.mxu0 0.0
  %280 = vmatpush1.msra.mxu0 0.0
  %281 = vmatprep.mubr.f32.mxu0 0.0
  %282 = vmatmul.mubr.f32.gmra.mrb[0].mxu0 %v215
  %v283 = vpop.f32.mrb[0].mxu0
  %v284 = vadd.f32 0.0, %v283
  %v285 = vpop.f32.mrb[0].mxu0
  %v286 = vadd.f32 0.0, %v285
  %287 = vdwg.mxu0
  %v288 = vadd.f32 %v196, %v284
  %v289 = vadd.f32 %v198, %v286
  %v290 = vld [vmem:[%s2] sm:$0xff]
  %292 = vset.pattern.permute.xlu0 0
  %293 = vperm.xlu0 %292, %v290
  %v294 = vpop.permute.xlu0 %293
  %v296 = vadd.f32 %v288, %v294
  %v297 = vadd.f32 %v289, %v294
  %v298 = vmax.f32 %v296, 0.0
  %v299 = vmax.f32 %v297, 0.0
  %v301 = vlaneseq
  %v302 = vshrl.u32 %v301, 7
  %v303 = vsub.s32 0, %v302
  %v304 = vrot.slane %v23, %v303
  %v305 = vlaneseq
  %v306 = vshrl.u32 %v305, 7
  %v307 = vsub.s32 1, %v306
  %v308 = vrot.slane %v23, %v307
  %v311 = vmul.f32 %v298, %v304
  %v312 = vmul.f32 %v299, %v308
  %313 = vst [vmem:[#allocation3] sm:$0xff] 0.0
  %314 = vst [vmem:[#allocation3 + $0x18] sm:$0xff] 0.0
  %315 = vst [vmem:[#allocation3 + $0x8] sm:$0xff] %v311
  %316 = vst [vmem:[#allocation3 + $0x10] sm:$0xff] %v312
  %v317 = vld [vmem:[#allocation3] sm:$0xff]
  %v318 = vld [vmem:[#allocation3 + $0x8] sm:$0xff]
  %v319 = vld [vmem:[#allocation3 + $0x10] sm:$0xff]
  %v320 = vld [vmem:[#allocation3 + $0x18] sm:$0xff]
  %v321 = vld [vmem:[%s3] sm:$0xff]
  %s322 = scalar_lea.vmem %s3, 8
  %v323 = vld [vmem:[%s322] sm:$0xff]
  %v325 = vsel %vm37, %v323, 0
  %327 = vmatprep.subr.mxu0 %v319
  %328 = vmatpush1.msra.mxu0 %v318
  %329 = vmatprep.subr.mxu0 0.0
  %330 = vmatpush1.msra.mxu0 0.0
  %331 = vmatprep.subr.mxu0 0.0
  %332 = vmatpush1.msra.mxu0 0.0
  %333 = vmatprep.subr.mxu0 0.0
  %334 = vmatpush1.msra.mxu0 0.0
  %335 = vmatprep.subr.mxu0 0.0
  %336 = vmatpush1.msra.mxu0 0.0
  %337 = vmatprep.subr.mxu0 0.0
  %338 = vmatpush1.msra.mxu0 0.0
  %339 = vmatprep.subr.mxu0 0.0
  %340 = vmatpush1.msra.mxu0 0.0
  %341 = vmatprep.subr.mxu0 0.0
  %342 = vmatpush1.msra.mxu0 0.0
  %343 = vmatprep.subr.mxu0 0.0
  %344 = vmatpush1.msra.mxu0 0.0
  %345 = vmatprep.subr.mxu0 0.0
  %346 = vmatpush1.msra.mxu0 0.0
  %347 = vmatprep.subr.mxu0 0.0
  %348 = vmatpush1.msra.mxu0 0.0
  %349 = vmatprep.subr.mxu0 0.0
  %350 = vmatpush1.msra.mxu0 0.0
  %351 = vmatprep.subr.mxu0 0.0
  %352 = vmatpush1.msra.mxu0 0.0
  %353 = vmatprep.subr.mxu0 0.0
  %354 = vmatpush1.msra.mxu0 0.0
  %355 = vmatprep.subr.mxu0 0.0
  %356 = vmatpush1.msra.mxu0 0.0
  %357 = vmatprep.subr.mxu0 0.0
  %358 = vmatpush1.msra.mxu0 0.0
  %359 = vmatprep.subr.mxu0 0.0
  %360 = vmatpush1.msra.mxu0 0.0
  %361 = vmatprep.subr.mxu0 0.0
  %362 = vmatpush1.msra.mxu0 0.0
  %363 = vmatprep.subr.mxu0 0.0
  %364 = vmatpush1.msra.mxu0 0.0
  %365 = vmatprep.subr.mxu0 0.0
  %366 = vmatpush1.msra.mxu0 0.0
  %367 = vmatprep.subr.mxu0 0.0
  %368 = vmatpush1.msra.mxu0 0.0
  %369 = vmatprep.subr.mxu0 0.0
  %370 = vmatpush1.msra.mxu0 0.0
  %371 = vmatprep.subr.mxu0 0.0
  %372 = vmatpush1.msra.mxu0 0.0
  %373 = vmatprep.subr.mxu0 0.0
  %374 = vmatpush1.msra.mxu0 0.0
  %375 = vmatprep.subr.mxu0 0.0
  %376 = vmatpush1.msra.mxu0 0.0
  %377 = vmatprep.subr.mxu0 0.0
  %378 = vmatpush1.msra.mxu0 0.0
  %379 = vmatprep.subr.mxu0 0.0
  %380 = vmatpush1.msra.mxu0 0.0
  %381 = vmatprep.subr.mxu0 0.0
  %382 = vmatpush1.msra.mxu0 0.0
  %383 = vmatprep.subr.mxu0 0.0
  %384 = vmatpush1.msra.mxu0 0.0
  %385 = vmatprep.subr.mxu0 0.0
  %386 = vmatpush1.msra.mxu0 0.0
  %387 = vmatprep.subr.mxu0 0.0
  %388 = vmatpush1.msra.mxu0 0.0
  %389 = vmatprep.subr.mxu0 0.0
  %390 = vmatpush1.msra.mxu0 0.0
  %391 = vmatprep.mubr.f32.mxu0 0.0
  %392 = vmatmul.mubr.f32.gmra.mrb[0].mxu0 %v325
  %v393 = vpop.f32.mrb[0].mxu0
  %v394 = vadd.f32 0.0, %v393
  %v395 = vpop.f32.mrb[0].mxu0
  %v396 = vadd.f32 0.0, %v395
  %397 = vdwg.mxu0
  %401 = vrot.lane.b32.xlu0 %v317, 1
  %v402 = vpop.permute.xlu0 %401
  %403 = vrot.lane.b32.xlu0 %v318, 1
  %v404 = vpop.permute.xlu0 %403
  %405 = vrot.lane.b32.xlu0 %v319, 1
  %v406 = vpop.permute.xlu0 %405
  %v407 = vsel %vm121, %v402, %v404
  %v408 = vsel %vm121, %v404, %v406
  %v412 = vsel %vm37, %v321, 0
  %414 = vmatprep.subr.mxu0 %v408
  %415 = vmatpush1.msra.mxu0 %v407
  %416 = vmatprep.subr.mxu0 0.0
  %417 = vmatpush1.msra.mxu0 0.0
  %418 = vmatprep.subr.mxu0 0.0
  %419 = vmatpush1.msra.mxu0 0.0
  %420 = vmatprep.subr.mxu0 0.0
  %421 = vmatpush1.msra.mxu0 0.0
  %422 = vmatprep.subr.mxu0 0.0
  %423 = vmatpush1.msra.mxu0 0.0
  %424 = vmatprep.subr.mxu0 0.0
  %425 = vmatpush1.msra.mxu0 0.0
  %426 = vmatprep.subr.mxu0 0.0
  %427 = vmatpush1.msra.mxu0 0.0
  %428 = vmatprep.subr.mxu0 0.0
  %429 = vmatpush1.msra.mxu0 0.0
  %430 = vmatprep.subr.mxu0 0.0
  %431 = vmatpush1.msra.mxu0 0.0
  %432 = vmatprep.subr.mxu0 0.0
  %433 = vmatpush1.msra.mxu0 0.0
  %434 = vmatprep.subr.mxu0 0.0
  %435 = vmatpush1.msra.mxu0 0.0
  %436 = vmatprep.subr.mxu0 0.0
  %437 = vmatpush1.msra.mxu0 0.0
  %438 = vmatprep.subr.mxu0 0.0
  %439 = vmatpush1.msra.mxu0 0.0
  %440 = vmatprep.subr.mxu0 0.0
  %441 = vmatpush1.msra.mxu0 0.0
  %442 = vmatprep.subr.mxu0 0.0
  %443 = vmatpush1.msra.mxu0 0.0
  %444 = vmatprep.subr.mxu0 0.0
  %445 = vmatpush1.msra.mxu0 0.0
  %446 = vmatprep.subr.mxu0 0.0
  %447 = vmatpush1.msra.mxu0 0.0
  %448 = vmatprep.subr.mxu0 0.0
  %449 = vmatpush1.msra.mxu0 0.0
  %450 = vmatprep.subr.mxu0 0.0
  %451 = vmatpush1.msra.mxu0 0.0
  %452 = vmatprep.subr.mxu0 0.0
  %453 = vmatpush1.msra.mxu0 0.0
  %454 = vmatprep.subr.mxu0 0.0
  %455 = vmatpush1.msra.mxu0 0.0
  %456 = vmatprep.subr.mxu0 0.0
  %457 = vmatpush1.msra.mxu0 0.0
  %458 = vmatprep.subr.mxu0 0.0
  %459 = vmatpush1.msra.mxu0 0.0
  %460 = vmatprep.subr.mxu0 0.0
  %461 = vmatpush1.msra.mxu0 0.0
  %462 = vmatprep.subr.mxu0 0.0
  %463 = vmatpush1.msra.mxu0 0.0
  %464 = vmatprep.subr.mxu0 0.0
  %465 = vmatpush1.msra.mxu0 0.0
  %466 = vmatprep.subr.mxu0 0.0
  %467 = vmatpush1.msra.mxu0 0.0
  %468 = vmatprep.subr.mxu0 0.0
  %469 = vmatpush1.msra.mxu0 0.0
  %470 = vmatprep.subr.mxu0 0.0
  %471 = vmatpush1.msra.mxu0 0.0
  %472 = vmatprep.subr.mxu0 0.0
  %473 = vmatpush1.msra.mxu0 0.0
  %474 = vmatprep.subr.mxu0 0.0
  %475 = vmatpush1.msra.mxu0 0.0
  %476 = vmatprep.subr.mxu0 0.0
  %477 = vmatpush1.msra.mxu0 0.0
  %478 = vmatprep.mubr.f32.mxu0 0.0
  %479 = vmatmul.mubr.f32.gmra.mrb[0].mxu0 %v412
  %v480 = vpop.f32.mrb[0].mxu0
  %v481 = vadd.f32 %v394, %v480
  %v482 = vpop.f32.mrb[0].mxu0
  %v483 = vadd.f32 %v396, %v482
  %484 = vdwg.mxu0
  %s485 = scalar_lea.vmem %s3, 16
  %v486 = vld [vmem:[%s485] sm:$0xff]
  %488 = vrot.lane.b32.xlu0 %v318, 127
  %v489 = vpop.permute.xlu0 %488
  %490 = vrot.lane.b32.xlu0 %v319, 127
  %v491 = vpop.permute.xlu0 %490
  %492 = vrot.lane.b32.xlu0 %v320, 127
  %v493 = vpop.permute.xlu0 %492
  %v494 = vsel %vm209, %v489, %v491
  %v495 = vsel %vm209, %v491, %v493
  %v499 = vsel %vm37, %v486, 0
  %501 = vmatprep.subr.mxu0 %v495
  %502 = vmatpush1.msra.mxu0 %v494
  %503 = vmatprep.subr.mxu0 0.0
  %504 = vmatpush1.msra.mxu0 0.0
  %505 = vmatprep.subr.mxu0 0.0
  %506 = vmatpush1.msra.mxu0 0.0
  %507 = vmatprep.subr.mxu0 0.0
  %508 = vmatpush1.msra.mxu0 0.0
  %509 = vmatprep.subr.mxu0 0.0
  %510 = vmatpush1.msra.mxu0 0.0
  %511 = vmatprep.subr.mxu0 0.0
  %512 = vmatpush1.msra.mxu0 0.0
  %513 = vmatprep.subr.mxu0 0.0
  %514 = vmatpush1.msra.mxu0 0.0
  %515 = vmatprep.subr.mxu0 0.0
  %516 = vmatpush1.msra.mxu0 0.0
  %517 = vmatprep.subr.mxu0 0.0
  %518 = vmatpush1.msra.mxu0 0.0
  %519 = vmatprep.subr.mxu0 0.0
  %520 = vmatpush1.msra.mxu0 0.0
  %521 = vmatprep.subr.mxu0 0.0
  %522 = vmatpush1.msra.mxu0 0.0
  %523 = vmatprep.subr.mxu0 0.0
  %524 = vmatpush1.msra.mxu0 0.0
  %525 = vmatprep.subr.mxu0 0.0
  %526 = vmatpush1.msra.mxu0 0.0
  %527 = vmatprep.subr.mxu0 0.0
  %528 = vmatpush1.msra.mxu0 0.0
  %529 = vmatprep.subr.mxu0 0.0
  %530 = vmatpush1.msra.mxu0 0.0
  %531 = vmatprep.subr.mxu0 0.0
  %532 = vmatpush1.msra.mxu0 0.0
  %533 = vmatprep.subr.mxu0 0.0
  %534 = vmatpush1.msra.mxu0 0.0
  %535 = vmatprep.subr.mxu0 0.0
  %536 = vmatpush1.msra.mxu0 0.0
  %537 = vmatprep.subr.mxu0 0.0
  %538 = vmatpush1.msra.mxu0 0.0
  %539 = vmatprep.subr.mxu0 0.0
  %540 = vmatpush1.msra.mxu0 0.0
  %541 = vmatprep.subr.mxu0 0.0
  %542 = vmatpush1.msra.mxu0 0.0
  %543 = vmatprep.subr.mxu0 0.0
  %544 = vmatpush1.msra.mxu0 0.0
  %545 = vmatprep.subr.mxu0 0.0
  %546 = vmatpush1.msra.mxu0 0.0
  %547 = vmatprep.subr.mxu0 0.0
  %548 = vmatpush1.msra.mxu0 0.0
  %549 = vmatprep.subr.mxu0 0.0
  %550 = vmatpush1.msra.mxu0 0.0
  %551 = vmatprep.subr.mxu0 0.0
  %552 = vmatpush1.msra.mxu0 0.0
  %553 = vmatprep.subr.mxu0 0.0
  %554 = vmatpush1.msra.mxu0 0.0
  %555 = vmatprep.subr.mxu0 0.0
  %556 = vmatpush1.msra.mxu0 0.0
  %557 = vmatprep.subr.mxu0 0.0
  %558 = vmatpush1.msra.mxu0 0.0
  %559 = vmatprep.subr.mxu0 0.0
  %560 = vmatpush1.msra.mxu0 0.0
  %561 = vmatprep.subr.mxu0 0.0
  %562 = vmatpush1.msra.mxu0 0.0
  %563 = vmatprep.subr.mxu0 0.0
  %564 = vmatpush1.msra.mxu0 0.0
  %565 = vmatprep.mubr.f32.mxu0 0.0
  %566 = vmatmul.mubr.f32.gmra.mrb[0].mxu0 %v499
  %v567 = vpop.f32.mrb[0].mxu0
  %v568 = vadd.f32 0.0, %v567
  %v569 = vpop.f32.mrb[0].mxu0
  %v570 = vadd.f32 0.0, %v569
  %571 = vdwg.mxu0
  %v572 = vadd.f32 %v481, %v568
  %v573 = vadd.f32 %v483, %v570
  %v574 = vld [vmem:[%s4] sm:$0xff]
  %576 = vset.pattern.permute.xlu0 0
  %577 = vperm.xlu0 %576, %v574
  %v578 = vpop.permute.xlu0 %577
  %v580 = vadd.f32 %v572, %v578
  %v581 = vadd.f32 %v573, %v578
  %v582 = vmax.f32 %v580, 0.0
  %v583 = vmax.f32 %v581, 0.0
  %584 = vst [vmem:[%s6] sm:$0xff] %v582
  %585 = vst [vmem:[%s6 + $0x8] sm:$0xff] %v583
  // Predicated region
  $region26: #{conv_block_forward.1} parent=0 // pred_check
    _
  $region27: #{conv_block_forward.1} parent=0 // pred_check_branch
    %587 = sbr.rel (0) target = $region29
  $region28: #{conv_block_forward.1} parent=0 // pred_region
    _
  $region29: #{conv_block_forward.1} parent=0 // pred_fallthru
    _
  // Predicated region
  $region30: #{conv_block_forward.1} parent=0 // pred_check
    _
  $region31: #{conv_block_forward.1} parent=0 // pred_check_branch
    %589 = sbr.rel (0) target = $region33
  $region32: #{conv_block_forward.1} parent=0 // pred_region
    _
  $region33: #{conv_block_forward.1} parent=0 // pred_fallthru
    _

</llo_original>
